<compile_context>
chip_gen: v6e
topology: v6e:2x2x1
jax: 0.10.0
libtpu: 0.0.40
codegen_flags: <defaults>
</compile_context>

<pallas_src>
import functools

import jax
import jax.numpy as jnp
from jax.experimental import pallas as pl
from jax.experimental.pallas import tpu as pltpu

SMOOTH_NR = 1e-5   # MONAI DiceLoss defaults
SMOOTH_DR = 1e-5

_BLOCK_BYTES_TARGET = 2 * 1024 * 1024   # ~2 MiB per input block


def _dice_bce_kernel(x_ref, t_ref, inter_ref, sumxt_ref, bce_ref, *,
                     true_r, true_s, need_row_mask, need_col_mask,
                     binary_targets):
    """One (TR, TS) tile: accumulate per-row partials into the resident outputs."""
    r = pl.program_id(0)
    s = pl.program_id(1)

    # Output blocks are resident across the spatial (reduction) axis: init once.
    @pl.when(s == 0)
    def _():
        inter_ref[...] = jnp.zeros_like(inter_ref)
        sumxt_ref[...] = jnp.zeros_like(sumxt_ref)
        bce_ref[...] = jnp.zeros_like(bce_ref)

    x = x_ref[...].astype(jnp.float32)
    t = t_ref[...].astype(jnp.float32)
    tr, ts = x.shape

    # Ragged-edge handling (only emitted when an edge is actually ragged).
    # OOB lanes/rows of a boundary block hold unspecified data, so make them
    # numerically safe BEFORE the logs, then zero their contributions.
    maskf = None
    if need_row_mask or need_col_mask:
        mask = None
        if need_row_mask:
            row_ids = jax.lax.broadcasted_iota(jnp.int32, (tr, ts), 0) + r * tr
            mask = row_ids < true_r
        if need_col_mask:
            col_ids = jax.lax.broadcasted_iota(jnp.int32, (tr, ts), 1) + s * ts
            cmask = col_ids < true_s
            mask = cmask if mask is None else (mask & cmask)
        x = jnp.where(mask, x, 0.5)   # safe for log / log1p
        t = jnp.where(mask, t, 0.0)
        maskf = mask.astype(jnp.float32)

    # ---- Dice partials (fused reductions: sum(t*x) and sum(t+x)) ----
    tx = t * x                         # masked region: t = 0 -> contributes 0
    txsum = t + x
    if maskf is not None:
        txsum = txsum * maskf
    inter_ref[...] += jnp.sum(tx, axis=-1, keepdims=True)
    sumxt_ref[...] += jnp.sum(txsum, axis=-1, keepdims=True)

    # ---- BCE partials (nn.BCELoss; torch clamps log at -100) ----
    if binary_targets:
        # Single-log fast path: halves EUP pushes (matters on v7x roofline).
        p = jnp.where(t >= 0.5, x, 1.0 - x)
        bce = -jnp.maximum(jnp.log(p), -100.0)
    else:
        log_x = jnp.maximum(jnp.log(x), -100.0)
        log_1mx = jnp.maximum(jnp.log1p(-x), -100.0)
        bce = -(t * log_x + (1.0 - t) * log_1mx)
    if maskf is not None:
        bce = bce * maskf
    bce_ref[...] += jnp.sum(bce, axis=-1, keepdims=True)


def _select_tiles(R, S, dtype_bytes, tile_s):
    # Row tile: multiple of 8 (or == R for tiny R); aim for >= 2 row tiles so
    # the v7x megacore can shard the "parallel" axis across its TensorCores.
    if R <= 8:
        TR = R
    else:
        TR = min(256, max(8, ((R // 2) // 8) * 8))
    num_r = pl.cdiv(R, TR)

    # Spatial tile: ~2 MiB per input block (HBM-streaming bound; keeps
    # 2 inputs x 2 pipeline buffers far under every generation's VMEM).
    if tile_s is None:
        ts_target = _BLOCK_BYTES_TARGET // max(1, TR * dtype_bytes)
        ts_target = max(512, min(ts_target, 32768))
    else:
        ts_target = max(128, tile_s)
    if S <= ts_target:
        TS = S                     # single spatial tile (block dim == full dim)
    else:
        TS = (ts_target // 128) * 128
    num_s = pl.cdiv(S, TS)
    return TR, num_r, TS, num_s


def dice_bce_loss(inputs, targets, *, dice_weight=0.5, bce_weight=0.5,
                  binary_targets=False, tile_s=None):
    """inputs, targets: (N, C, H, W); inputs are probabilities in (0, 1).

    bf16 or f32 inputs accepted; accumulation is always f32 in-kernel.
    Set binary_targets=True when targets are exactly {0, 1} for a single-log
    BCE fast path.
    """
    n, c, h, w = inputs.shape
    R = n * c
    S = h * w
    x2 = inputs.reshape(R, S)
    t2 = targets.reshape(R, S)

    dtype_bytes = jnp.dtype(inputs.dtype).itemsize
    TR, num_r, TS, num_s = _select_tiles(R, S, dtype_bytes, tile_s)
    need_row_mask = (num_r * TR != R)
    need_col_mask = (num_s * TS != S)

    block_bytes = TR * TS * dtype_bytes
    # Raise the scoped VMEM limit (v5e defaults to 16 MiB); stay well under
    # v7x's 64 MiB physical VMEM.
    vmem_limit = int(min(48 << 20, max(32 << 20, 8 * block_bytes)))

    kernel = functools.partial(
        _dice_bce_kernel,
        true_r=R, true_s=S,
        need_row_mask=need_row_mask, need_col_mask=need_col_mask,
        binary_targets=binary_targets)

    inter, sumxt, bce_rows = pl.pallas_call(
        kernel,
        out_shape=(
            jax.ShapeDtypeStruct((R, 1), jnp.float32),
            jax.ShapeDtypeStruct((R, 1), jnp.float32),
            jax.ShapeDtypeStruct((R, 1), jnp.float32),
        ),
        grid=(num_r, num_s),
        in_specs=[
            pl.BlockSpec((TR, TS), lambda r, s: (r, s)),
            pl.BlockSpec((TR, TS), lambda r, s: (r, s)),
        ],
        out_specs=(
            pl.BlockSpec((TR, 1), lambda r, s: (r, 0)),
            pl.BlockSpec((TR, 1), lambda r, s: (r, 0)),
            pl.BlockSpec((TR, 1), lambda r, s: (r, 0)),
        ),
        compiler_params=pltpu.CompilerParams(
            dimension_semantics=("parallel", "arbitrary"),
            vmem_limit_bytes=vmem_limit),
        cost_estimate=pl.CostEstimate(
            flops=int(6 * R * S),
            transcendentals=int((1 if binary_targets else 2) * R * S),
            bytes_accessed=int(2 * R * S * dtype_bytes + 3 * R * 4)),
    )(x2, t2)

    # Tiny (R, 1) finalize in the wrapper: means use the TRUE R and R*S.
    dice_per_row = 1.0 - (2.0 * inter + SMOOTH_NR) / (sumxt + SMOOTH_DR)
    dice_loss = jnp.sum(dice_per_row) / R
    bce_loss = jnp.sum(bce_rows) / (R * S)
    return dice_weight * dice_loss + bce_weight * bce_loss


def _reference(inputs, targets, dice_weight=0.5, bce_weight=0.5):
    x = inputs.astype(jnp.float32)
    t = targets.astype(jnp.float32)
    inter = jnp.sum(t * x, axis=(2, 3))
    denom = jnp.sum(t, axis=(2, 3)) + jnp.sum(x, axis=(2, 3))
    dice = jnp.mean(1.0 - (2.0 * inter + SMOOTH_NR) / (denom + SMOOTH_DR))
    bce = jnp.mean(-(t * jnp.maximum(jnp.log(x), -100.0)
                     + (1.0 - t) * jnp.maximum(jnp.log1p(-x), -100.0)))
    return dice_weight * dice + bce_weight * bce


if __name__ == "__main__":
    key = jax.random.PRNGKey(0)
    k1, k2, k3, k4 = jax.random.split(key, 4)

    # --- Case 1: small, single-block path (N=2, C=4, H=W=16) ---
    N, C, H, W = 2, 4, 16, 16
    inputs = jax.nn.sigmoid(jax.random.normal(k1, (N, C, H, W), dtype=jnp.float32))
    targets = (jax.random.uniform(k2, (N, C, H, W)) > 0.5).astype(jnp.float32)

    loss = dice_bce_loss(inputs, targets)
    jax.block_until_ready(loss)
    ref = _reference(inputs, targets)
    assert jnp.allclose(loss, ref, rtol=1e-4, atol=1e-6), (loss, ref)

    # --- Case 2: ragged row AND column tiles + megacore-style grid ---
    # R = 10 -> TR = 8 with a ragged last row tile; S = 2400 with tile_s=512
    # -> 5 spatial tiles, ragged last tile (in-kernel masking path).
    N2, C2, H2, W2 = 2, 5, 48, 50
    inputs2 = jax.nn.sigmoid(jax.random.normal(k3, (N2, C2, H2, W2), dtype=jnp.float32))
    targets2 = (jax.random.uniform(k4, (N2, C2, H2, W2)) > 0.5).astype(jnp.float32)

    loss2 = dice_bce_loss(inputs2, targets2, tile_s=512)
    jax.block_until_ready(loss2)
    ref2 = _reference(inputs2, targets2)
    assert jnp.allclose(loss2, ref2, rtol=1e-4, atol=1e-6), (loss2, ref2)

    # --- Case 3: binary-target single-log BCE fast path ---
    loss3 = dice_bce_loss(inputs2, targets2, tile_s=512, binary_targets=True)
    jax.block_until_ready(loss3)
    assert jnp.allclose(loss3, ref2, rtol=1e-4, atol=1e-6), (loss3, ref2)

    # --- Case 4: bf16 inputs (no wrapper pre-cast; f32 accumulation in-kernel) ---
    inputs4 = inputs.astype(jnp.bfloat16)
    targets4 = targets.astype(jnp.bfloat16)
    loss4 = dice_bce_loss(inputs4, targets4)
    jax.block_until_ready(loss4)
    ref4 = _reference(inputs4, targets4)
    assert jnp.allclose(loss4, ref4, rtol=1e-3, atol=1e-5), (loss4, ref4)

    print("KERNEL_OK")
</pallas_src>

<mosaic_0001>
module attributes {stable_mosaic.version = 11 : i64} {
  func.func @_dice_bce_kernel(%arg0: i32, %arg1: i32, %arg2: memref<8x256xf32, #tpu.memory_space<vmem>>, %arg3: memref<8x256xf32, #tpu.memory_space<vmem>>, %arg4: memref<8x1xf32, #tpu.memory_space<vmem>>, %arg5: memref<8x1xf32, #tpu.memory_space<vmem>>, %arg6: memref<8x1xf32, #tpu.memory_space<vmem>>) attributes {dimension_semantics = [#tpu.dimension_semantics<parallel>, #tpu.dimension_semantics<arbitrary>], iteration_bounds = array<i64: 1, 1>, scalar_prefetch = 0 : i64, scratch_operands = 0 : i64, tpu.core_type = #tpu.core_type<tc>, window_params = [{transform_indices = @transform_0, window_bounds = array<i64: 8, 256>}, {transform_indices = @transform_1, window_bounds = array<i64: 8, 256>}, {transform_indices = @transform_2, window_bounds = array<i64: 8, 1>}, {transform_indices = @transform_3, window_bounds = array<i64: 8, 1>}, {transform_indices = @transform_4, window_bounds = array<i64: 8, 1>}]} {
    %c0_i32 = arith.constant 0 : i32
    %0 = arith.cmpi eq, %arg1, %c0_i32 : i32
    %1 = arith.extui %0 : i1 to i32
    %c0_i32_0 = arith.constant 0 : i32
    %2 = arith.cmpi ne, %1, %c0_i32_0 : i32
    scf.if %2 {
      %cst_23 = arith.constant 0.000000e+00 : f32
      %37 = vector.broadcast %cst_23 : f32 to vector<8x1xf32>
      %c0_24 = arith.constant 0 : index
      %c0_25 = arith.constant 0 : index
      %38 = vector.load %arg4[%c0_24, %c0_25] : memref<8x1xf32, #tpu.memory_space<vmem>>, vector<8x1xf32>
      tpu.vector_store %arg4[%c0_24, %c0_25], %37 {strides = array<i32>} : memref<8x1xf32, #tpu.memory_space<vmem>>, vector<8x1xf32>,
      %cst_26 = arith.constant 0.000000e+00 : f32
      %39 = vector.broadcast %cst_26 : f32 to vector<8x1xf32>
      %c0_27 = arith.constant 0 : index
      %c0_28 = arith.constant 0 : index
      %40 = vector.load %arg5[%c0_27, %c0_28] : memref<8x1xf32, #tpu.memory_space<vmem>>, vector<8x1xf32>
      tpu.vector_store %arg5[%c0_27, %c0_28], %39 {strides = array<i32>} : memref<8x1xf32, #tpu.memory_space<vmem>>, vector<8x1xf32>,
      %cst_29 = arith.constant 0.000000e+00 : f32
      %41 = vector.broadcast %cst_29 : f32 to vector<8x1xf32>
      %c0_30 = arith.constant 0 : index
      %c0_31 = arith.constant 0 : index
      %42 = vector.load %arg6[%c0_30, %c0_31] : memref<8x1xf32, #tpu.memory_space<vmem>>, vector<8x1xf32>
      tpu.vector_store %arg6[%c0_30, %c0_31], %41 {strides = array<i32>} : memref<8x1xf32, #tpu.memory_space<vmem>>, vector<8x1xf32>,
    } else {
    }
    %c0 = arith.constant 0 : index
    %c0_1 = arith.constant 0 : index
    %3 = vector.load %arg2[%c0, %c0_1] : memref<8x256xf32, #tpu.memory_space<vmem>>, vector<8x256xf32>
    %c0_2 = arith.constant 0 : index
    %c0_3 = arith.constant 0 : index
    %4 = vector.load %arg3[%c0_2, %c0_3] : memref<8x256xf32, #tpu.memory_space<vmem>>, vector<8x256xf32>
    %5 = arith.mulf %4, %3 : vector<8x256xf32>
    %6 = arith.addf %4, %3 : vector<8x256xf32>
    %c0_4 = arith.constant 0 : index
    %c0_5 = arith.constant 0 : index
    %7 = vector.load %arg4[%c0_4, %c0_5] : memref<8x1xf32, #tpu.memory_space<vmem>>, vector<8x1xf32>
    %cst = arith.constant dense<0.000000e+00> : vector<8xf32>
    %8 = vector.multi_reduction <add>, %5, %cst [1] : vector<8x256xf32> to vector<8xf32>
    %9 = vector.shape_cast %8 : vector<8xf32> to vector<8x1xf32>
    %10 = arith.addf %7, %9 : vector<8x1xf32>
    %c0_6 = arith.constant 0 : index
    %c0_7 = arith.constant 0 : index
    %11 = vector.load %arg4[%c0_6, %c0_7] : memref<8x1xf32, #tpu.memory_space<vmem>>, vector<8x1xf32>
    tpu.vector_store %arg4[%c0_6, %c0_7], %10 {strides = array<i32>} : memref<8x1xf32, #tpu.memory_space<vmem>>, vector<8x1xf32>,
    %c0_8 = arith.constant 0 : index
    %c0_9 = arith.constant 0 : index
    %12 = vector.load %arg5[%c0_8, %c0_9] : memref<8x1xf32, #tpu.memory_space<vmem>>, vector<8x1xf32>
    %cst_10 = arith.constant dense<0.000000e+00> : vector<8xf32>
    %13 = vector.multi_reduction <add>, %6, %cst_10 [1] : vector<8x256xf32> to vector<8xf32>
    %14 = vector.shape_cast %13 : vector<8xf32> to vector<8x1xf32>
    %15 = arith.addf %12, %14 : vector<8x1xf32>
    %c0_11 = arith.constant 0 : index
    %c0_12 = arith.constant 0 : index
    %16 = vector.load %arg5[%c0_11, %c0_12] : memref<8x1xf32, #tpu.memory_space<vmem>>, vector<8x1xf32>
    tpu.vector_store %arg5[%c0_11, %c0_12], %15 {strides = array<i32>} : memref<8x1xf32, #tpu.memory_space<vmem>>, vector<8x1xf32>,
    %17 = math.log %3 : vector<8x256xf32>
    %cst_13 = arith.constant -1.000000e+02 : f32
    %18 = vector.broadcast %cst_13 : f32 to vector<8x256xf32>
    %19 = arith.maximumf %17, %18 : vector<8x256xf32>
    %cst_14 = arith.constant 0.000000e+00 : f32
    %20 = vector.broadcast %cst_14 : f32 to vector<8x256xf32>
    %21 = arith.subf %20, %3 : vector<8x256xf32>
    %22 = math.log1p %21 : vector<8x256xf32>
    %cst_15 = arith.constant -1.000000e+02 : f32
    %23 = vector.broadcast %cst_15 : f32 to vector<8x256xf32>
    %24 = arith.maximumf %22, %23 : vector<8x256xf32>
    %25 = arith.mulf %4, %19 : vector<8x256xf32>
    %cst_16 = arith.constant 1.000000e+00 : f32
    %26 = vector.broadcast %cst_16 : f32 to vector<8x256xf32>
    %27 = arith.subf %26, %4 : vector<8x256xf32>
    %28 = arith.mulf %27, %24 : vector<8x256xf32>
    %29 = arith.addf %25, %28 : vector<8x256xf32>
    %cst_17 = arith.constant 0.000000e+00 : f32
    %30 = vector.broadcast %cst_17 : f32 to vector<8x256xf32>
    %31 = arith.subf %30, %29 : vector<8x256xf32>
    %c0_18 = arith.constant 0 : index
    %c0_19 = arith.constant 0 : index
    %32 = vector.load %arg6[%c0_18, %c0_19] : memref<8x1xf32, #tpu.memory_space<vmem>>, vector<8x1xf32>
    %cst_20 = arith.constant dense<0.000000e+00> : vector<8xf32>
    %33 = vector.multi_reduction <add>, %31, %cst_20 [1] : vector<8x256xf32> to vector<8xf32>
    %34 = vector.shape_cast %33 : vector<8xf32> to vector<8x1xf32>
    %35 = arith.addf %32, %34 : vector<8x1xf32>
    %c0_21 = arith.constant 0 : index
    %c0_22 = arith.constant 0 : index
    %36 = vector.load %arg6[%c0_21, %c0_22] : memref<8x1xf32, #tpu.memory_space<vmem>>, vector<8x1xf32>
    tpu.vector_store %arg6[%c0_21, %c0_22], %35 {strides = array<i32>} : memref<8x1xf32, #tpu.memory_space<vmem>>, vector<8x1xf32>,
    return
  }
  func.func @transform_0(%arg0: i32, %arg1: i32) -> (i32, i32) {
    %c0_i32 = arith.constant 0 : i32
    return %arg0, %arg1 : i32, i32
  }
  func.func @transform_1(%arg0: i32, %arg1: i32) -> (i32, i32) {
    %c0_i32 = arith.constant 0 : i32
    return %arg0, %arg1 : i32, i32
  }
  func.func @transform_2(%arg0: i32, %arg1: i32) -> (i32, i32) {
    %c0_i32 = arith.constant 0 : i32
    %c0_i32_0 = arith.constant 0 : i32
    return %arg0, %c0_i32 : i32, i32
  }
  func.func @transform_3(%arg0: i32, %arg1: i32) -> (i32, i32) {
    %c0_i32 = arith.constant 0 : i32
    %c0_i32_0 = arith.constant 0 : i32
    return %arg0, %c0_i32 : i32, i32
  }
  func.func @transform_4(%arg0: i32, %arg1: i32) -> (i32, i32) {
    %c0_i32 = arith.constant 0 : i32
    %c0_i32_0 = arith.constant 0 : i32
    return %arg0, %c0_i32 : i32, i32
  }
}

</mosaic_0001>

<llo_original>
// kernel: tpu_custom_call.1
$region0: #{tpu_custom_call.1}
  #allocation0 [shape = 'u32[]', space=smem, size = 0x4, offset = 0x4, fixed_abs, tag = 'smem constant byte address 0x4 - core index']
  #allocation1 [shape = 'u32[144,128]{1,0:T(1,128)}', space=vmem, size = 0x12000, scoped, tag = 'internal scratch']
  %s0 = inlined_call_operand.hbm [shape: f32[8,256], index: 0, kind: input, shape index: {}]
  %s1 = inlined_call_operand.hbm [shape: f32[8,256], index: 1, kind: input, shape index: {}]
  %s2 = inlined_call_operand.vmem [shape: f32[8,1], index: 2, kind: output, shape index: {0}]
  %s3 = inlined_call_operand.vmem [shape: f32[8,1], index: 3, kind: output, shape index: {1}]
  %s4 = inlined_call_operand.vmem [shape: f32[8,1], index: 4, kind: output, shape index: {2}]
  %5 = xla_tuple %s2, %s3, %s4
  %s6 = sld [smem:[#allocation0]]
  $region46: #{tpu_custom_call.1} parent=0
    _
  %s8 = ssub.s32 1, %s6
  %s9 = scalar_select 0, %s8, %s6
  $region1: #{tpu_custom_call.1} parent=0
    #allocation2 [shape = 'u8[8192]{0}', space=vmem, size = 0x2000, scoped, tag = 'input window, operand 0, single buffered']
    #allocation3 [shape = 's32[1]{0}', space=sflag, size = 0x4, scoped, tag = 'scoped memory for tpu_custom_call.1']
    #allocation4 [shape = 'u8[8192]{0}', space=vmem, size = 0x2000, scoped, tag = 'input window, operand 1, single buffered']
    #allocation5 [shape = 's32[1]{0}', space=sflag, size = 0x4, scoped, tag = 'scoped memory for tpu_custom_call.1']
    %10 = vsyncpa [#allocation3], 0
    %11 = vsyncpa [#allocation5], 0
    // Predicated region
    $region2: #{tpu_custom_call.1} parent=1 // pred_check
      _
    $region3: #{tpu_custom_call.1} parent=1 // pred_check_branch
      %13 = sbr.rel (0) target = $region5
    $region4: #{tpu_custom_call.1} parent=1 // pred_region
      %s15 = ssub.s32 256, 256
      %16 = vsyncadd [#allocation3], %s15
      %s18 = sshll.u32 [#allocation2], 4
      %s19 = int_to_ptr.vmem [resolvable:$true] %s18
      %21 = dma.hbm_to_vmem [thread:$0]  %s0, 256, %s19, [#allocation3]
    $region5: #{tpu_custom_call.1} parent=1 // pred_fallthru
      _
    // Predicated region
    $region6: #{tpu_custom_call.1} parent=1 // pred_check
      _
    $region7: #{tpu_custom_call.1} parent=1 // pred_check_branch
      %23 = sbr.rel (0) target = $region9
    $region8: #{tpu_custom_call.1} parent=1 // pred_region
      %s25 = ssub.s32 256, 256
      %26 = vsyncadd [#allocation5], %s25
      %s28 = sshll.u32 [#allocation4], 4
      %s29 = int_to_ptr.vmem [resolvable:$true] %s28
      %31 = dma.hbm_to_vmem [thread:$0]  %s1, 256, %s29, [#allocation5]
    $region9: #{tpu_custom_call.1} parent=1 // pred_fallthru
      _
    // Predicated region
    $region10: #{tpu_custom_call.1} parent=1 // pred_check
      _
    $region11: #{tpu_custom_call.1} parent=1 // pred_check_branch
      %33 = sbr.rel (0) target = $region13
    $region12: #{tpu_custom_call.1} parent=1 // pred_region
      %34 = dma.done [#allocation3], 256
    $region13: #{tpu_custom_call.1} parent=1 // pred_fallthru
      _
    // Predicated region
    $region14: #{tpu_custom_call.1} parent=1 // pred_check
      _
    $region15: #{tpu_custom_call.1} parent=1 // pred_check_branch
      %36 = sbr.rel (0) target = $region17
    $region16: #{tpu_custom_call.1} parent=1 // pred_region
      %37 = dma.done [#allocation5], 256
    $region17: #{tpu_custom_call.1} parent=1 // pred_fallthru
      _
    %p38 = scmp.eq.s32.totalorder 0, 0
    // Predicated region
    $region18: #{tpu_custom_call.1} parent=1 // pred_check
      %p39 = pneg %p38
    $region19: #{tpu_custom_call.1} parent=1 // pred_check_branch
      %41 = sbr.rel (%p39) target = $region21
    $region20: #{tpu_custom_call.1} parent=1 // pred_region
      %vm42 = vcmask 7168
      %43 = vst.msk [vmem:[%s2] sm:$0xff] %vm42, 0.0
      %44 = vst.msk [vmem:[%s3] sm:$0xff] %vm42, 0.0
      %45 = vst.msk [vmem:[%s4] sm:$0xff] %vm42, 0.0
    $region21: #{tpu_custom_call.1} parent=1 // pred_fallthru
      _
    %v46 = vld [vmem:[#allocation2] sm:$0xff]
    %v47 = vld [vmem:[#allocation2 + $0x8] sm:$0xff]
    %v48 = vld [vmem:[#allocation4] sm:$0xff]
    %v49 = vld [vmem:[#allocation4 + $0x8] sm:$0xff]
    %v50 = vmul.f32 %v48, %v46
    %v51 = vmul.f32 %v49, %v47
    %v52 = vadd.f32 %v48, %v46
    %v53 = vadd.f32 %v49, %v47
    %v54 = vld [vmem:[%s2] sm:$0xff]
    %v55 = vadd.f32 %v50, %v51
    %56 = vadd.xlane.f32.xlu0 %v55
    %v57 = vpop.xlane.xlu0 %56
    %v58 = vadd.f32 %v54, %v57
    %vm59 = vcmask 7168
    %60 = vst.msk [vmem:[%s2] sm:$0xff] %vm59, %v58
    %v61 = vld [vmem:[%s3] sm:$0xff]
    %v62 = vadd.f32 %v52, %v53
    %63 = vadd.xlane.f32.xlu0 %v62
    %v64 = vpop.xlane.xlu0 %63
    %v65 = vadd.f32 %v61, %v64
    %66 = vst.msk [vmem:[%s3] sm:$0xff] %vm59, %v65
    %v67 = vlog2.pop %v46
    %v68 = vmul.f32 %v67, 0.6931472
    %v69 = vlog2.pop %v47
    %v70 = vmul.f32 %v69, 0.6931472
    %v71 = vmax.f32 %v68, -100.0
    %v72 = vmax.f32 %v70, -100.0
    %v73 = vsub.f32 0.0, %v46
    %v74 = vsub.f32 0.0, %v47
    %v75 = vadd.f32 %v73, 1.0
    %v76 = vlog2.pop %v75
    %v77 = vmul.f32 %v76, 0.6931472
    %v78 = vmul.f32 -0.5, %v73
    %v79 = vadd.f32 %v78, 1.0
    %v80 = vmul.f32 %v79, %v73
    %v81 = vand.u32 2147483647, %v73
    %vm82 = vcmp.lt.f32.partialorder %v81, 0.0004427343
    %v83 = vsel %vm82, %v80, %v77
    %v84 = vadd.f32 %v74, 1.0
    %v85 = vlog2.pop %v84
    %v86 = vmul.f32 %v85, 0.6931472
    %v87 = vmul.f32 -0.5, %v74
    %v88 = vadd.f32 %v87, 1.0
    %v89 = vmul.f32 %v88, %v74
    %v90 = vand.u32 2147483647, %v74
    %vm91 = vcmp.lt.f32.partialorder %v90, 0.0004427343
    %v92 = vsel %vm91, %v89, %v86
    %v93 = vmax.f32 %v83, -100.0
    %v94 = vmax.f32 %v92, -100.0
    %v95 = vmul.f32 %v48, %v71
    %v96 = vmul.f32 %v49, %v72
    %v97 = vsub.f32 1.0, %v48
    %v98 = vsub.f32 1.0, %v49
    %v99 = vmul.f32 %v97, %v93
    %v100 = vmul.f32 %v98, %v94
    %v101 = vadd.f32 %v95, %v99
    %v102 = vadd.f32 %v96, %v100
    %v103 = vsub.f32 0.0, %v101
    %v104 = vsub.f32 0.0, %v102
    %v105 = vld [vmem:[%s4] sm:$0xff]
    %v106 = vadd.f32 %v103, %v104
    %107 = vadd.xlane.f32.xlu0 %v106
    %v108 = vpop.xlane.xlu0 %107
    %v109 = vadd.f32 %v105, %v108
    %110 = vst.msk [vmem:[%s4] sm:$0xff] %vm59, %v109
    // Predicated region
    $region22: #{tpu_custom_call.1} parent=1 // pred_check
      _
    $region23: #{tpu_custom_call.1} parent=1 // pred_check_branch
      %112 = sbr.rel (0) target = $region25
    $region24: #{tpu_custom_call.1} parent=1 // pred_region
      _
    $region25: #{tpu_custom_call.1} parent=1 // pred_fallthru
      _
    // Predicated region
    $region26: #{tpu_custom_call.1} parent=1 // pred_check
      _
    $region27: #{tpu_custom_call.1} parent=1 // pred_check_branch
      %114 = sbr.rel (0) target = $region29
    $region28: #{tpu_custom_call.1} parent=1 // pred_region
      _
    $region29: #{tpu_custom_call.1} parent=1 // pred_fallthru
      _
    // Predicated region
    $region30: #{tpu_custom_call.1} parent=1 // pred_check
      _
    $region31: #{tpu_custom_call.1} parent=1 // pred_check_branch
      %116 = sbr.rel (0) target = $region33
    $region32: #{tpu_custom_call.1} parent=1 // pred_region
      _
    $region33: #{tpu_custom_call.1} parent=1 // pred_fallthru
      _
    // Predicated region
    $region34: #{tpu_custom_call.1} parent=1 // pred_check
      _
    $region35: #{tpu_custom_call.1} parent=1 // pred_check_branch
      %118 = sbr.rel (0) target = $region37
    $region36: #{tpu_custom_call.1} parent=1 // pred_region
      _
    $region37: #{tpu_custom_call.1} parent=1 // pred_fallthru
      _
    // Predicated region
    $region38: #{tpu_custom_call.1} parent=1 // pred_check
      _
    $region39: #{tpu_custom_call.1} parent=1 // pred_check_branch
      %120 = sbr.rel (0) target = $region41
    $region40: #{tpu_custom_call.1} parent=1 // pred_region
      _
    $region41: #{tpu_custom_call.1} parent=1 // pred_fallthru
      _
    // Predicated region
    $region42: #{tpu_custom_call.1} parent=1 // pred_check
      _
    $region43: #{tpu_custom_call.1} parent=1 // pred_check_branch
      %122 = sbr.rel (0) target = $region45
    $region44: #{tpu_custom_call.1} parent=1 // pred_region
      _
    $region45: #{tpu_custom_call.1} parent=1 // pred_fallthru
      _
    %123 = vsyncpa [#allocation3], 1
    %124 = vsyncpa [#allocation5], 1

</llo_original>
